<compile_context>
chip_gen: v7x
topology: tpu7x:2x2x1
jax: 0.10.0
libtpu: 0.0.40
codegen_flags: <defaults>
</compile_context>

<pallas_src>
import math

import jax
import jax.numpy as jnp
from jax import lax
from jax.experimental import pallas as pl
from jax.experimental.pallas import tpu as pltpu  # noqa: F401  (TPU backend)


def _self_attention_kernel(x_ref, w_ref, b_ref, out_ref, attn_ref):
    # x_ref:    (B*S, F)   flattened tokens
    # w_ref:    (F, 3*P)   [Q | K | V], each lane-padded to P=128; Q pre-scaled
    # b_ref:    (1, 3*P)   matching biases (padding lanes are zero)
    # out_ref:  (B, S, P)  lane-dense output; wrapper slices [..., :D]
    # attn_ref: (B, S, S)  softmax attention weights
    B, S, P = out_ref.shape

    # One fused projection for all B*S rows: (B*S, F) @ (F, 3P) -> (B*S, 3P).
    qkv = jnp.dot(x_ref[...], w_ref[...],
                  preferred_element_type=jnp.float32) + b_ref[...]

    # Clean lane-tile slices (each starts on a 128-lane boundary).
    q = qkv[:, 0 * P:1 * P]   # already scaled by 1/sqrt(D); lanes >= D are zero
    k = qkv[:, 1 * P:2 * P]
    v = qkv[:, 2 * P:3 * P]

    # Tiny static batch loop (B=2), unrolled at trace time.  Each slice below
    # is static and starts on an 8-sublane boundary (S=8), so no relayout.
    for b in range(B):
        qb = q[b * S:(b + 1) * S, :]
        kb = k[b * S:(b + 1) * S, :]
        vb = v[b * S:(b + 1) * S, :]

        # Q K^T by contracting the feature/lane dim of both operands directly;
        # zero-padded lanes contribute nothing, so this equals the D-dim dot.
        scores = lax.dot_general(
            qb, kb, (((1,), (1,)), ((), ())),
            preferred_element_type=jnp.float32)                       # (S, S)

        # Numerically stable softmax over the last dim.
        m = jnp.max(scores, axis=-1, keepdims=True)
        e = jnp.exp(scores - m)
        denom = jnp.sum(e, axis=-1, keepdims=True)
        # approx=True (EUP vrcp) saves only a few cycles on an (S,1) vector but
        # loosens the 1e-4 f32 parity check -> keep the exact path.
        w = e * pl.reciprocal(denom, approx=False)                    # (S, S)

        attn_ref[b] = w
        out_ref[b] = jnp.dot(w, vb, preferred_element_type=jnp.float32)  # (S, P)


def self_attention(x, wq, bq, wk, bk, wv, bv):
    """x: (B, S, F) f32; w*: (F, D) f32 (pre-transposed vs torch); b*: (D,) f32.

    Returns (out, attention_weights) matching
    torch: softmax(Q K^T / sqrt(D)) @ V with Q/K/V = Linear(22, D)(x).
    """
    B, S, F = x.shape
    D = wq.shape[1]
    P = 128  # pad each of the Q/K/V column blocks to one full lane tile

    scale = 1.0 / math.sqrt(float(D))  # torch divides scores by input_dim ** 0.5

    # Fused, lane-padded QKV weights; fold the score scale into the Q slice.
    w_qkv = jnp.zeros((F, 3 * P), jnp.float32)
    w_qkv = w_qkv.at[:, 0:D].set(wq * scale)
    w_qkv = w_qkv.at[:, P:P + D].set(wk)
    w_qkv = w_qkv.at[:, 2 * P:2 * P + D].set(wv)

    b_qkv = jnp.zeros((1, 3 * P), jnp.float32)
    b_qkv = b_qkv.at[:, 0:D].set(bq * scale)
    b_qkv = b_qkv.at[:, P:P + D].set(bk)
    b_qkv = b_qkv.at[:, 2 * P:2 * P + D].set(bv)

    # Feed the MXU all B*S rows in a single projection matmul.
    xf = x.reshape(B * S, F)

    out_padded, attn = pl.pallas_call(
        _self_attention_kernel,
        out_shape=(
            jax.ShapeDtypeStruct((B, S, P), jnp.float32),
            jax.ShapeDtypeStruct((B, S, S), jnp.float32),
        ),
    )(xf, w_qkv, b_qkv)

    return out_padded[..., :D], attn


def _reference(x, wq, bq, wk, bk, wv, bv):
    q = x @ wq + bq
    k = x @ wk + bk
    v = x @ wv + bv
    d = wq.shape[1]
    scores = jnp.einsum("bsd,btd->bst", q, k) / math.sqrt(float(d))
    w = jax.nn.softmax(scores, axis=-1)
    return jnp.einsum("bst,btd->bsd", w, v), w


if __name__ == "__main__":
    B, S, F, D = 2, 8, 22, 32   # input_dim = 32; feature dim fixed at 22 by the module

    key = jax.random.PRNGKey(0)
    kx, kwq, kbq, kwk, kbk, kwv, kbv = jax.random.split(key, 7)

    x = jax.random.normal(kx, (B, S, F), dtype=jnp.float32)

    # Deterministic init mimicking nn.Linear(22, D): U(-1/sqrt(22), 1/sqrt(22)).
    bound = 1.0 / math.sqrt(F)
    init = lambda k, shape: jax.random.uniform(k, shape, jnp.float32, -bound, bound)
    # stored pre-transposed: (F, D) so that x @ W == torch's x @ W.T
    wq, bq = init(kwq, (F, D)), init(kbq, (D,))
    wk, bk = init(kwk, (F, D)), init(kbk, (D,))
    wv, bv = init(kwv, (F, D)), init(kbv, (D,))

    out, attn = self_attention(x, wq, bq, wk, bk, wv, bv)
    jax.block_until_ready((out, attn))

    ref_out, ref_attn = _reference(x, wq, bq, wk, bk, wv, bv)
    assert out.shape == (B, S, D) and attn.shape == (B, S, S)
    assert jnp.allclose(out, ref_out, atol=1e-4, rtol=1e-4)
    assert jnp.allclose(attn, ref_attn, atol=1e-4, rtol=1e-4)

    print("KERNEL_OK")
</pallas_src>

<mosaic_0001>
module attributes {stable_mosaic.version = 11 : i64} {
  func.func @_self_attention_kernel(%arg0: memref<16x22xf32, #tpu.memory_space<vmem>>, %arg1: memref<22x384xf32, #tpu.memory_space<vmem>>, %arg2: memref<1x384xf32, #tpu.memory_space<vmem>>, %arg3: memref<2x8x128xf32, #tpu.memory_space<vmem>>, %arg4: memref<2x8x8xf32, #tpu.memory_space<vmem>>) attributes {dimension_semantics = [], scalar_prefetch = 0 : i64, scratch_operands = 0 : i64, tpu.core_type = #tpu.core_type<tc>} {
    %c0 = arith.constant 0 : index
    %c0_0 = arith.constant 0 : index
    %0 = vector.load %arg0[%c0, %c0_0] : memref<16x22xf32, #tpu.memory_space<vmem>>, vector<16x22xf32>
    %c0_1 = arith.constant 0 : index
    %c0_2 = arith.constant 0 : index
    %1 = vector.load %arg1[%c0_1, %c0_2] : memref<22x384xf32, #tpu.memory_space<vmem>>, vector<22x384xf32>
    %cst = arith.constant dense<0.000000e+00> : vector<16x384xf32>
    %2 = tpu.matmul %0, %1, %cst {dimension_numbers = #tpu.dot_dimension_numbers<[1], [0], [0], [1], [0, 0, 1, 1], [], []>} : vector<16x22xf32>, vector<22x384xf32>, vector<16x384xf32> -> vector<16x384xf32>
    %c0_3 = arith.constant 0 : index
    %c0_4 = arith.constant 0 : index
    %3 = vector.load %arg2[%c0_3, %c0_4] : memref<1x384xf32, #tpu.memory_space<vmem>>, vector<1x384xf32>
    %4 = vector.broadcast %3 : vector<1x384xf32> to vector<16x384xf32>
    %5 = arith.addf %2, %4 : vector<16x384xf32>
    %6 = vector.extract_strided_slice %5 {offsets = [0, 0], sizes = [16, 128], strides = [1, 1]} : vector<16x384xf32> to vector<16x128xf32>
    %7 = vector.extract_strided_slice %5 {offsets = [0, 128], sizes = [16, 128], strides = [1, 1]} : vector<16x384xf32> to vector<16x128xf32>
    %8 = vector.extract_strided_slice %5 {offsets = [0, 256], sizes = [16, 128], strides = [1, 1]} : vector<16x384xf32> to vector<16x128xf32>
    %9 = vector.extract_strided_slice %6 {offsets = [0, 0], sizes = [8, 128], strides = [1, 1]} : vector<16x128xf32> to vector<8x128xf32>
    %10 = vector.extract_strided_slice %7 {offsets = [0, 0], sizes = [8, 128], strides = [1, 1]} : vector<16x128xf32> to vector<8x128xf32>
    %11 = vector.extract_strided_slice %8 {offsets = [0, 0], sizes = [8, 128], strides = [1, 1]} : vector<16x128xf32> to vector<8x128xf32>
    %cst_5 = arith.constant dense<0.000000e+00> : vector<8x8xf32>
    %12 = tpu.matmul %9, %10, %cst_5 {dimension_numbers = #tpu.dot_dimension_numbers<[1], [1], [0], [0], [0, 0, 1, 0], [], []>} : vector<8x128xf32>, vector<8x128xf32>, vector<8x8xf32> -> vector<8x8xf32>
    %cst_6 = arith.constant dense<0xFF800000> : vector<8xf32>
    %13 = vector.multi_reduction <maximumf>, %12, %cst_6 [1] : vector<8x8xf32> to vector<8xf32>
    %14 = vector.shape_cast %13 : vector<8xf32> to vector<8x1xf32>
    %15 = vector.broadcast %14 : vector<8x1xf32> to vector<8x8xf32>
    %16 = arith.subf %12, %15 : vector<8x8xf32>
    %17 = math.exp %16 : vector<8x8xf32>
    %cst_7 = arith.constant dense<0.000000e+00> : vector<8xf32>
    %18 = vector.multi_reduction <add>, %17, %cst_7 [1] : vector<8x8xf32> to vector<8xf32>
    %19 = vector.shape_cast %18 : vector<8xf32> to vector<8x1xf32>
    %20 = tpu.reciprocal %19 : vector<8x1xf32> -> vector<8x1xf32>
    %21 = vector.broadcast %20 : vector<8x1xf32> to vector<8x8xf32>
    %22 = arith.mulf %17, %21 : vector<8x8xf32>
    %c0_8 = arith.constant 0 : index
    %c0_9 = arith.constant 0 : index
    %c0_10 = arith.constant 0 : index
    %23 = vector.load %arg4[%c0_8, %c0_9, %c0_10] : memref<2x8x8xf32, #tpu.memory_space<vmem>>, vector<1x8x8xf32>
    %24 = vector.shape_cast %23 : vector<1x8x8xf32> to vector<8x8xf32>
    %25 = vector.shape_cast %22 : vector<8x8xf32> to vector<1x8x8xf32>
    tpu.vector_store %arg4[%c0_8, %c0_9, %c0_10], %25 {strides = array<i32>} : memref<2x8x8xf32, #tpu.memory_space<vmem>>, vector<1x8x8xf32>,
    %cst_11 = arith.constant dense<0.000000e+00> : vector<8x128xf32>
    %26 = tpu.matmul %22, %11, %cst_11 {dimension_numbers = #tpu.dot_dimension_numbers<[1], [0], [0], [1], [0, 0, 1, 1], [], []>} : vector<8x8xf32>, vector<8x128xf32>, vector<8x128xf32> -> vector<8x128xf32>
    %c0_12 = arith.constant 0 : index
    %c0_13 = arith.constant 0 : index
    %c0_14 = arith.constant 0 : index
    %27 = vector.load %arg3[%c0_12, %c0_13, %c0_14] : memref<2x8x128xf32, #tpu.memory_space<vmem>>, vector<1x8x128xf32>
    %28 = vector.shape_cast %27 : vector<1x8x128xf32> to vector<8x128xf32>
    %29 = vector.shape_cast %26 : vector<8x128xf32> to vector<1x8x128xf32>
    tpu.vector_store %arg3[%c0_12, %c0_13, %c0_14], %29 {strides = array<i32>} : memref<2x8x128xf32, #tpu.memory_space<vmem>>, vector<1x8x128xf32>,
    %30 = vector.extract_strided_slice %6 {offsets = [8, 0], sizes = [8, 128], strides = [1, 1]} : vector<16x128xf32> to vector<8x128xf32>
    %31 = vector.extract_strided_slice %7 {offsets = [8, 0], sizes = [8, 128], strides = [1, 1]} : vector<16x128xf32> to vector<8x128xf32>
    %32 = vector.extract_strided_slice %8 {offsets = [8, 0], sizes = [8, 128], strides = [1, 1]} : vector<16x128xf32> to vector<8x128xf32>
    %cst_15 = arith.constant dense<0.000000e+00> : vector<8x8xf32>
    %33 = tpu.matmul %30, %31, %cst_15 {dimension_numbers = #tpu.dot_dimension_numbers<[1], [1], [0], [0], [0, 0, 1, 0], [], []>} : vector<8x128xf32>, vector<8x128xf32>, vector<8x8xf32> -> vector<8x8xf32>
    %cst_16 = arith.constant dense<0xFF800000> : vector<8xf32>
    %34 = vector.multi_reduction <maximumf>, %33, %cst_16 [1] : vector<8x8xf32> to vector<8xf32>
    %35 = vector.shape_cast %34 : vector<8xf32> to vector<8x1xf32>
    %36 = vector.broadcast %35 : vector<8x1xf32> to vector<8x8xf32>
    %37 = arith.subf %33, %36 : vector<8x8xf32>
    %38 = math.exp %37 : vector<8x8xf32>
    %cst_17 = arith.constant dense<0.000000e+00> : vector<8xf32>
    %39 = vector.multi_reduction <add>, %38, %cst_17 [1] : vector<8x8xf32> to vector<8xf32>
    %40 = vector.shape_cast %39 : vector<8xf32> to vector<8x1xf32>
    %41 = tpu.reciprocal %40 : vector<8x1xf32> -> vector<8x1xf32>
    %42 = vector.broadcast %41 : vector<8x1xf32> to vector<8x8xf32>
    %43 = arith.mulf %38, %42 : vector<8x8xf32>
    %c1 = arith.constant 1 : index
    %c0_18 = arith.constant 0 : index
    %c0_19 = arith.constant 0 : index
    %44 = vector.load %arg4[%c1, %c0_18, %c0_19] : memref<2x8x8xf32, #tpu.memory_space<vmem>>, vector<1x8x8xf32>
    %45 = vector.shape_cast %44 : vector<1x8x8xf32> to vector<8x8xf32>
    %46 = vector.shape_cast %43 : vector<8x8xf32> to vector<1x8x8xf32>
    tpu.vector_store %arg4[%c1, %c0_18, %c0_19], %46 {strides = array<i32>} : memref<2x8x8xf32, #tpu.memory_space<vmem>>, vector<1x8x8xf32>,
    %cst_20 = arith.constant dense<0.000000e+00> : vector<8x128xf32>
    %47 = tpu.matmul %43, %32, %cst_20 {dimension_numbers = #tpu.dot_dimension_numbers<[1], [0], [0], [1], [0, 0, 1, 1], [], []>} : vector<8x8xf32>, vector<8x128xf32>, vector<8x128xf32> -> vector<8x128xf32>
    %c1_21 = arith.constant 1 : index
    %c0_22 = arith.constant 0 : index
    %c0_23 = arith.constant 0 : index
    %48 = vector.load %arg3[%c1_21, %c0_22, %c0_23] : memref<2x8x128xf32, #tpu.memory_space<vmem>>, vector<1x8x128xf32>
    %49 = vector.shape_cast %48 : vector<1x8x128xf32> to vector<8x128xf32>
    %50 = vector.shape_cast %47 : vector<8x128xf32> to vector<1x8x128xf32>
    tpu.vector_store %arg3[%c1_21, %c0_22, %c0_23], %50 {strides = array<i32>} : memref<2x8x128xf32, #tpu.memory_space<vmem>>, vector<1x8x128xf32>,
    return
  }
}

</mosaic_0001>

<llo_original>
// kernel: tpu_custom_call.1
$region0: #{tpu_custom_call.1}
  #allocation0 [shape = 'u32[]', space=smem, size = 0x4, offset = 0x4, fixed_abs, tag = 'smem constant byte address 0x4 - core index']
  #allocation1 [shape = 'u32[144,128]{1,0:T(1,128)}', space=vmem, size = 0x12000, scoped, tag = 'internal scratch']
  %s0 = inlined_call_operand.hbm [shape: f32[16,22], index: 0, kind: input, shape index: {}]
  %s1 = inlined_call_operand.hbm [shape: f32[22,384], index: 1, kind: input, shape index: {}]
  %s2 = inlined_call_operand.vmem [shape: f32[1,384], index: 2, kind: input, shape index: {}]
  %s3 = inlined_call_operand.hbm [shape: f32[2,8,128], index: 3, kind: output, shape index: {0}]
  %s4 = inlined_call_operand.hbm [shape: f32[2,8,8], index: 4, kind: output, shape index: {1}]
  %5 = xla_tuple %s3, %s4
  %s6 = sld [smem:[#allocation0]]
  $region38: #{tpu_custom_call.1} parent=0
    _
  %s8 = ssub.s32 1, %s6
  %s9 = scalar_select 0, %s8, %s6
  $region1: #{tpu_custom_call.1} parent=0
    #allocation2 [shape = 'u8[8192]{0}', space=vmem, size = 0x2000, scoped, tag = 'input window, operand 0, single buffered']
    #allocation3 [shape = 's32[1]{0}', space=sflag, size = 0x4, scoped, tag = 'scoped memory for tpu_custom_call.1']
    #allocation4 [shape = 's32[1]{0}', space=sflag, size = 0x4, scoped, tag = 'scoped memory for tpu_custom_call.1']
    #allocation5 [shape = 'u8[36864]{0}', space=vmem, size = 0x9000, scoped, tag = 'input window, operand 1, single buffered']
    #allocation6 [shape = 's32[1]{0}', space=sflag, size = 0x4, scoped, tag = 'scoped memory for tpu_custom_call.1']
    #allocation7 [shape = 'u8[8192]{0}', space=vmem, size = 0x2000, scoped, tag = 'output window, operand 0, single buffered']
    #allocation8 [shape = 'u8[8192]{0}', space=vmem, size = 0x2000, scoped, tag = 'output window, operand 1, single buffered']
    #allocation9 [shape = 's32[1]{0}', space=sflag, size = 0x4, scoped, tag = 'scoped memory for tpu_custom_call.1']
    %10 = vsyncpa [#allocation3], 0
    %11 = vsyncpa [#allocation6], 0
    %12 = vsyncpa [#allocation4], 0
    %13 = vsyncpa [#allocation9], 0
    // Predicated region
    $region2: #{tpu_custom_call.1} parent=1 // pred_check
      _
    $region3: #{tpu_custom_call.1} parent=1 // pred_check_branch
      %15 = sbr.rel (0) target = $region5
    $region4: #{tpu_custom_call.1} parent=1 // pred_region
      %s17 = ssub.s32 256, 256
      %18 = vsyncadd [#allocation3], %s17
      %s19 = sshll.u32 [#allocation2], 4
      %s20 = int_to_ptr.vmem [resolvable:$true] %s19
      %25 = dma.hbm_to_vmem [thread:$0]  %s0, 256, %s20, [#allocation3], 128, 128, 8
    $region5: #{tpu_custom_call.1} parent=1 // pred_fallthru
      _
    // Predicated region
    $region6: #{tpu_custom_call.1} parent=1 // pred_check
      _
    $region7: #{tpu_custom_call.1} parent=1 // pred_check_branch
      %27 = sbr.rel (0) target = $region9
    $region8: #{tpu_custom_call.1} parent=1 // pred_region
      %s29 = ssub.s32 1152, 1152
      %30 = vsyncadd [#allocation6], %s29
      %s31 = sshll.u32 [#allocation5], 4
      %s32 = int_to_ptr.vmem [resolvable:$true] %s31
      %37 = dma.hbm_to_vmem [thread:$0]  %s1, 1152, %s32, [#allocation6], 384, 384, 24
    $region9: #{tpu_custom_call.1} parent=1 // pred_fallthru
      _
    // Predicated region
    $region10: #{tpu_custom_call.1} parent=1 // pred_check
      _
    $region11: #{tpu_custom_call.1} parent=1 // pred_check_branch
      %39 = sbr.rel (0) target = $region13
    $region12: #{tpu_custom_call.1} parent=1 // pred_region
      _
    $region13: #{tpu_custom_call.1} parent=1 // pred_fallthru
      _
    // Predicated region
    $region14: #{tpu_custom_call.1} parent=1 // pred_check
      _
    $region15: #{tpu_custom_call.1} parent=1 // pred_check_branch
      %41 = sbr.rel (0) target = $region17
    $region16: #{tpu_custom_call.1} parent=1 // pred_region
      %42 = dma.done [#allocation3], 256
    $region17: #{tpu_custom_call.1} parent=1 // pred_fallthru
      _
    // Predicated region
    $region18: #{tpu_custom_call.1} parent=1 // pred_check
      _
    $region19: #{tpu_custom_call.1} parent=1 // pred_check_branch
      %44 = sbr.rel (0) target = $region21
    $region20: #{tpu_custom_call.1} parent=1 // pred_region
      %45 = dma.done [#allocation6], 1152
    $region21: #{tpu_custom_call.1} parent=1 // pred_fallthru
      _
    %v46 = vld [vmem:[#allocation2] sm:$0xff]
    %v47 = vld [vmem:[#allocation2 + $0x8] sm:$0xff]
    %v48 = vld [vmem:[#allocation5] sm:$0xff]
    %v49 = vld [vmem:[#allocation5 + $0x8] sm:$0xff]
    %v50 = vld [vmem:[#allocation5 + $0x10] sm:$0xff]
    %v51 = vld [vmem:[#allocation5 + $0x18] sm:$0xff]
    %v52 = vld [vmem:[#allocation5 + $0x20] sm:$0xff]
    %v53 = vld [vmem:[#allocation5 + $0x28] sm:$0xff]
    %v54 = vld [vmem:[#allocation5 + $0x30] sm:$0x3f]
    %v55 = vld [vmem:[#allocation5 + $0x38] sm:$0x3f]
    %v56 = vld [vmem:[#allocation5 + $0x40] sm:$0x3f]
    %v57 = vld [vmem:[%s2] sm:$0x7]
    %v59 = vlaneseq
    %v60 = vshrl.u32 %v59, 7
    %v61 = vsub.s32 0, %v60
    %v62 = vrot.slane %v57, %v61
    %v63 = vlaneseq
    %v64 = vshrl.u32 %v63, 7
    %v65 = vsub.s32 1, %v64
    %v66 = vrot.slane %v57, %v65
    %v67 = vlaneseq
    %v68 = vshrl.u32 %v67, 7
    %v69 = vsub.s32 2, %v68
    %v70 = vrot.slane %v57, %v69
    %vm74 = vcmask 179200
    %v76 = vsel %vm74, %v46, 0
    %v79 = vsel %vm74, %v47, 0
    %vm81 = vcmask 1045504
    %v83 = vsel %vm81, %v54, 0
    %v86 = vsel %vm81, %v55, 0
    %v89 = vsel %vm81, %v56, 0
    %91 = vmatprep.subr.mxu0 %v49
    %92 = vmatpush1.msra.mxu0 %v48
    %93 = vmatprep.subr.mxu0 %v52
    %94 = vmatpush1.msra.mxu0 %v51
    %95 = vmatprep.subr.mxu0 %v86
    %96 = vmatpush1.msra.mxu0 %v83
    %97 = vmatprep.subr.mxu0 0.0
    %98 = vmatpush1.msra.mxu0 0.0
    %99 = vmatprep.subr.mxu0 0.0
    %100 = vmatpush1.msra.mxu0 0.0
    %101 = vmatprep.subr.mxu0 0.0
    %102 = vmatpush1.msra.mxu0 0.0
    %103 = vmatprep.subr.mxu0 0.0
    %104 = vmatpush1.msra.mxu0 0.0
    %105 = vmatprep.subr.mxu0 0.0
    %106 = vmatpush1.msra.mxu0 0.0
    %107 = vmatprep.subr.mxu0 0.0
    %108 = vmatpush1.msra.mxu0 0.0
    %109 = vmatprep.subr.mxu0 0.0
    %110 = vmatpush1.msra.mxu0 0.0
    %111 = vmatprep.subr.mxu0 0.0
    %112 = vmatpush1.msra.mxu0 0.0
    %113 = vmatprep.subr.mxu0 0.0
    %114 = vmatpush1.msra.mxu0 0.0
    %115 = vmatprep.subr.mxu0 0.0
    %116 = vmatpush1.msra.mxu0 0.0
    %117 = vmatprep.subr.mxu0 0.0
    %118 = vmatpush1.msra.mxu0 0.0
    %119 = vmatprep.subr.mxu0 0.0
    %120 = vmatpush1.msra.mxu0 0.0
    %121 = vmatprep.subr.mxu0 0.0
    %122 = vmatpush1.msra.mxu0 0.0
    %123 = vmatprep.subr.mxu0 0.0
    %124 = vmatpush1.msra.mxu0 0.0
    %125 = vmatprep.subr.mxu0 0.0
    %126 = vmatpush1.msra.mxu0 0.0
    %127 = vmatprep.subr.mxu0 0.0
    %128 = vmatpush1.msra.mxu0 0.0
    %129 = vmatprep.subr.mxu0 0.0
    %130 = vmatpush1.msra.mxu0 0.0
    %131 = vmatprep.subr.mxu0 0.0
    %132 = vmatpush1.msra.mxu0 0.0
    %133 = vmatprep.subr.mxu0 0.0
    %134 = vmatpush1.msra.mxu0 0.0
    %135 = vmatprep.subr.mxu0 0.0
    %136 = vmatpush1.msra.mxu0 0.0
    %137 = vmatprep.subr.mxu0 0.0
    %138 = vmatpush1.msra.mxu0 0.0
    %139 = vmatprep.subr.mxu0 0.0
    %140 = vmatpush1.msra.mxu0 0.0
    %141 = vmatprep.subr.mxu0 0.0
    %142 = vmatpush1.msra.mxu0 0.0
    %143 = vmatprep.subr.mxu0 0.0
    %144 = vmatpush1.msra.mxu0 0.0
    %145 = vmatprep.subr.mxu0 0.0
    %146 = vmatpush1.msra.mxu0 0.0
    %147 = vmatprep.subr.mxu0 0.0
    %148 = vmatpush1.msra.mxu0 0.0
    %149 = vmatprep.subr.mxu0 0.0
    %150 = vmatpush1.msra.mxu0 0.0
    %151 = vmatprep.subr.mxu0 0.0
    %152 = vmatpush1.msra.mxu0 0.0
    %153 = vmatprep.subr.mxu0 0.0
    %154 = vmatpush1.msra.mxu0 0.0
    %155 = vmatprep.mubr.f32.mxu0 0.0
    %156 = vmatmul.mubr.f32.gmra.mrb[0].mxu0 %v76
    %v157 = vpop.f32.mrb[0].mxu0
    %v158 = vadd.f32 %v62, %v157
    %v159 = vpop.f32.mrb[0].mxu0
    %v160 = vadd.f32 %v66, %v159
    %161 = vmatprep.mubr.f32.mxu0 0.0
    %162 = vmatmul.mubr.f32.gmra.mrb[0].mxu0 %v79
    %v163 = vpop.f32.mrb[0].mxu0
    %v164 = vadd.f32 %v62, %v163
    %v165 = vpop.f32.mrb[0].mxu0
    %v166 = vadd.f32 %v66, %v165
    %167 = vdwg.mxu0
    %168 = vmatprep.subr.mxu0 0.0
    %169 = vmatpush1.msra.mxu0 %v50
    %170 = vmatprep.subr.mxu0 0.0
    %171 = vmatpush1.msra.mxu0 %v53
    %172 = vmatprep.subr.mxu0 0.0
    %173 = vmatpush1.msra.mxu0 %v89
    %174 = vmatprep.subr.mxu0 0.0
    %175 = vmatpush1.msra.mxu0 0.0
    %176 = vmatprep.subr.mxu0 0.0
    %177 = vmatpush1.msra.mxu0 0.0
    %178 = vmatprep.subr.mxu0 0.0
    %179 = vmatpush1.msra.mxu0 0.0
    %180 = vmatprep.subr.mxu0 0.0
    %181 = vmatpush1.msra.mxu0 0.0
    %182 = vmatprep.subr.mxu0 0.0
    %183 = vmatpush1.msra.mxu0 0.0
    %184 = vmatprep.subr.mxu0 0.0
    %185 = vmatpush1.msra.mxu0 0.0
    %186 = vmatprep.subr.mxu0 0.0
    %187 = vmatpush1.msra.mxu0 0.0
    %188 = vmatprep.subr.mxu0 0.0
    %189 = vmatpush1.msra.mxu0 0.0
    %190 = vmatprep.subr.mxu0 0.0
    %191 = vmatpush1.msra.mxu0 0.0
    %192 = vmatprep.subr.mxu0 0.0
    %193 = vmatpush1.msra.mxu0 0.0
    %194 = vmatprep.subr.mxu0 0.0
    %195 = vmatpush1.msra.mxu0 0.0
    %196 = vmatprep.subr.mxu0 0.0
    %197 = vmatpush1.msra.mxu0 0.0
    %198 = vmatprep.subr.mxu0 0.0
    %199 = vmatpush1.msra.mxu0 0.0
    %200 = vmatprep.subr.mxu0 0.0
    %201 = vmatpush1.msra.mxu0 0.0
    %202 = vmatprep.subr.mxu0 0.0
    %203 = vmatpush1.msra.mxu0 0.0
    %204 = vmatprep.subr.mxu0 0.0
    %205 = vmatpush1.msra.mxu0 0.0
    %206 = vmatprep.subr.mxu0 0.0
    %207 = vmatpush1.msra.mxu0 0.0
    %208 = vmatprep.subr.mxu0 0.0
    %209 = vmatpush1.msra.mxu0 0.0
    %210 = vmatprep.subr.mxu0 0.0
    %211 = vmatpush1.msra.mxu0 0.0
    %212 = vmatprep.subr.mxu0 0.0
    %213 = vmatpush1.msra.mxu0 0.0
    %214 = vmatprep.subr.mxu0 0.0
    %215 = vmatpush1.msra.mxu0 0.0
    %216 = vmatprep.subr.mxu0 0.0
    %217 = vmatpush1.msra.mxu0 0.0
    %218 = vmatprep.subr.mxu0 0.0
    %219 = vmatpush1.msra.mxu0 0.0
    %220 = vmatprep.subr.mxu0 0.0
    %221 = vmatpush1.msra.mxu0 0.0
    %222 = vmatprep.subr.mxu0 0.0
    %223 = vmatpush1.msra.mxu0 0.0
    %224 = vmatprep.subr.mxu0 0.0
    %225 = vmatpush1.msra.mxu0 0.0
    %226 = vmatprep.subr.mxu0 0.0
    %227 = vmatpush1.msra.mxu0 0.0
    %228 = vmatprep.subr.mxu0 0.0
    %229 = vmatpush1.msra.mxu0 0.0
    %230 = vmatprep.subr.mxu0 0.0
    %231 = vmatpush1.msra.mxu0 0.0
    %232 = vmatprep.mubr.f32.mxu0 0.0
    %233 = vmatmul.mubr.f32.gmra.mrb[0].mxu0 %v76
    %v234 = vpop.f32.mrb[0].mxu0
    %v235 = vadd.f32 %v70, %v234
    %v236 = vpop.f32.mrb[0].mxu0
    %237 = vmatprep.mubr.f32.mxu0 0.0
    %238 = vmatmul.mubr.f32.gmra.mrb[0].mxu0 %v79
    %v239 = vpop.f32.mrb[0].mxu0
    %v240 = vadd.f32 %v70, %v239
    %v241 = vpop.f32.mrb[0].mxu0
    %242 = vdwg.mxu0
    %243 = vmatprep.subr.mxu0 0.0
    %244 = vmatpush1.xpose.msra.mxu0 %v160
    %245 = vmatprep.subr.mxu0 0.0
    %246 = vmatpush1.xpose.msra.mxu0 0.0
    %247 = vmatprep.subr.mxu0 0.0
    %248 = vmatpush1.xpose.msra.mxu0 0.0
    %249 = vmatprep.subr.mxu0 0.0
    %250 = vmatpush1.xpose.msra.mxu0 0.0
    %251 = vmatprep.subr.mxu0 0.0
    %252 = vmatpush1.xpose.msra.mxu0 0.0
    %253 = vmatprep.subr.mxu0 0.0
    %254 = vmatpush1.xpose.msra.mxu0 0.0
    %255 = vmatprep.subr.mxu0 0.0
    %256 = vmatpush1.xpose.msra.mxu0 0.0
    %257 = vmatprep.subr.mxu0 0.0
    %258 = vmatpush1.xpose.msra.mxu0 0.0
    %259 = vmatprep.subr.mxu0 0.0
    %260 = vmatpush1.xpose.msra.mxu0 0.0
    %261 = vmatprep.subr.mxu0 0.0
    %262 = vmatpush1.xpose.msra.mxu0 0.0
    %263 = vmatprep.subr.mxu0 0.0
    %264 = vmatpush1.xpose.msra.mxu0 0.0
    %265 = vmatprep.subr.mxu0 0.0
    %266 = vmatpush1.xpose.msra.mxu0 0.0
    %267 = vmatprep.subr.mxu0 0.0
    %268 = vmatpush1.xpose.msra.mxu0 0.0
    %269 = vmatprep.subr.mxu0 0.0
    %270 = vmatpush1.xpose.msra.mxu0 0.0
    %271 = vmatprep.subr.mxu0 0.0
    %272 = vmatpush1.xpose.msra.mxu0 0.0
    %273 = vmatprep.subr.mxu0 0.0
    %274 = vmatpush1.xpose.msra.mxu0 0.0
    %275 = vmatprep.subr.mxu0 0.0
    %276 = vmatpush1.xpose.msra.mxu0 0.0
    %277 = vmatprep.subr.mxu0 0.0
    %278 = vmatpush1.xpose.msra.mxu0 0.0
    %279 = vmatprep.subr.mxu0 0.0
    %280 = vmatpush1.xpose.msra.mxu0 0.0
    %281 = vmatprep.subr.mxu0 0.0
    %282 = vmatpush1.xpose.msra.mxu0 0.0
    %283 = vmatprep.subr.mxu0 0.0
    %284 = vmatpush1.xpose.msra.mxu0 0.0
    %285 = vmatprep.subr.mxu0 0.0
    %286 = vmatpush1.xpose.msra.mxu0 0.0
    %287 = vmatprep.subr.mxu0 0.0
    %288 = vmatpush1.xpose.msra.mxu0 0.0
    %289 = vmatprep.subr.mxu0 0.0
    %290 = vmatpush1.xpose.msra.mxu0 0.0
    %291 = vmatprep.subr.mxu0 0.0
    %292 = vmatpush1.xpose.msra.mxu0 0.0
    %293 = vmatprep.subr.mxu0 0.0
    %294 = vmatpush1.xpose.msra.mxu0 0.0
    %295 = vmatprep.subr.mxu0 0.0
    %296 = vmatpush1.xpose.msra.mxu0 0.0
    %297 = vmatprep.subr.mxu0 0.0
    %298 = vmatpush1.xpose.msra.mxu0 0.0
    %299 = vmatprep.subr.mxu0 0.0
    %300 = vmatpush1.xpose.msra.mxu0 0.0
    %301 = vmatprep.subr.mxu0 0.0
    %302 = vmatpush1.xpose.msra.mxu0 0.0
    %303 = vmatprep.subr.mxu0 0.0
    %304 = vmatpush1.xpose.msra.mxu0 0.0
    %305 = vmatprep.subr.mxu0 0.0
    %306 = vmatpush1.xpose.msra.mxu0 0.0
    %307 = vmatprep.mubr.f32.mxu0 0.0
    %308 = vmatmul.mubr.f32.gmra.mrb[0].mxu0 %v158
    %v309 = vpop.f32.mrb[0].mxu0
    %v310 = vadd.f32 0.0, %v309
    %v311 = vpop.f32.mrb[0].mxu0
    %312 = vdwg.mxu0
    %vm313 = vcmask 64512
    %v314 = vsel %vm313, %v310, -inf
    %315 = vmax.xlane.f32.xlu0 %v314
    %v316 = vpop.xlane.xlu0 %315
    %v317 = vsub.f32 %v310, %v316
    %v318 = vmul.f32 %v317, 1.442695
    %v319 = vpow.pop %v318
    %v320 = vsel %vm313, %v319, 0.0
    %321 = vadd.xlane.f32.xlu0 %v320
    %v322 = vpop.xlane.xlu0 %321
    %v323 = vrcp.pop %v322
    %v324 = vmul.f32 %v319, %v323
    %325 = vst.msk [vmem:[#allocation8] sm:$0xff] %vm313, %v324
    %v327 = vsel %vm313, %v324, 0
    %329 = vmatprep.subr.mxu0 0.0
    %330 = vmatpush1.msra.mxu0 %v235
    %331 = vmatprep.subr.mxu0 0.0
    %332 = vmatpush1.msra.mxu0 0.0
    %333 = vmatprep.subr.mxu0 0.0
    %334 = vmatpush1.msra.mxu0 0.0
    %335 = vmatprep.subr.mxu0 0.0
    %336 = vmatpush1.msra.mxu0 0.0
    %337 = vmatprep.subr.mxu0 0.0
    %338 = vmatpush1.msra.mxu0 0.0
    %339 = vmatprep.subr.mxu0 0.0
    %340 = vmatpush1.msra.mxu0 0.0
    %341 = vmatprep.subr.mxu0 0.0
    %342 = vmatpush1.msra.mxu0 0.0
    %343 = vmatprep.subr.mxu0 0.0
    %344 = vmatpush1.msra.mxu0 0.0
    %345 = vmatprep.subr.mxu0 0.0
    %346 = vmatpush1.msra.mxu0 0.0
    %347 = vmatprep.subr.mxu0 0.0
    %348 = vmatpush1.msra.mxu0 0.0
    %349 = vmatprep.subr.mxu0 0.0
    %350 = vmatpush1.msra.mxu0 0.0
    %351 = vmatprep.subr.mxu0 0.0
    %352 = vmatpush1.msra.mxu0 0.0
    %353 = vmatprep.subr.mxu0 0.0
    %354 = vmatpush1.msra.mxu0 0.0
    %355 = vmatprep.subr.mxu0 0.0
    %356 = vmatpush1.msra.mxu0 0.0
    %357 = vmatprep.subr.mxu0 0.0
    %358 = vmatpush1.msra.mxu0 0.0
    %359 = vmatprep.subr.mxu0 0.0
    %360 = vmatpush1.msra.mxu0 0.0
    %361 = vmatprep.subr.mxu0 0.0
    %362 = vmatpush1.msra.mxu0 0.0
    %363 = vmatprep.subr.mxu0 0.0
    %364 = vmatpush1.msra.mxu0 0.0
    %365 = vmatprep.subr.mxu0 0.0
    %366 = vmatpush1.msra.mxu0 0.0
    %367 = vmatprep.subr.mxu0 0.0
    %368 = vmatpush1.msra.mxu0 0.0
    %369 = vmatprep.subr.mxu0 0.0
    %370 = vmatpush1.msra.mxu0 0.0
    %371 = vmatprep.subr.mxu0 0.0
    %372 = vmatpush1.msra.mxu0 0.0
    %373 = vmatprep.subr.mxu0 0.0
    %374 = vmatpush1.msra.mxu0 0.0
    %375 = vmatprep.subr.mxu0 0.0
    %376 = vmatpush1.msra.mxu0 0.0
    %377 = vmatprep.subr.mxu0 0.0
    %378 = vmatpush1.msra.mxu0 0.0
    %379 = vmatprep.subr.mxu0 0.0
    %380 = vmatpush1.msra.mxu0 0.0
    %381 = vmatprep.subr.mxu0 0.0
    %382 = vmatpush1.msra.mxu0 0.0
    %383 = vmatprep.subr.mxu0 0.0
    %384 = vmatpush1.msra.mxu0 0.0
    %385 = vmatprep.subr.mxu0 0.0
    %386 = vmatpush1.msra.mxu0 0.0
    %387 = vmatprep.subr.mxu0 0.0
    %388 = vmatpush1.msra.mxu0 0.0
    %389 = vmatprep.subr.mxu0 0.0
    %390 = vmatpush1.msra.mxu0 0.0
    %391 = vmatprep.subr.mxu0 0.0
    %392 = vmatpush1.msra.mxu0 0.0
    %393 = vmatprep.mubr.f32.mxu0 0.0
    %394 = vmatmul.mubr.f32.gmra.mrb[0].mxu0 %v327
    %v395 = vpop.f32.mrb[0].mxu0
    %v396 = vadd.f32 0.0, %v395
    %v397 = vpop.f32.mrb[0].mxu0
    %398 = vdwg.mxu0
    %399 = vst [vmem:[#allocation7] sm:$0xff] %v396
    %400 = vmatprep.subr.mxu0 0.0
    %401 = vmatpush1.xpose.msra.mxu0 %v166
    %402 = vmatprep.subr.mxu0 0.0
    %403 = vmatpush1.xpose.msra.mxu0 0.0
    %404 = vmatprep.subr.mxu0 0.0
    %405 = vmatpush1.xpose.msra.mxu0 0.0
    %406 = vmatprep.subr.mxu0 0.0
    %407 = vmatpush1.xpose.msra.mxu0 0.0
    %408 = vmatprep.subr.mxu0 0.0
    %409 = vmatpush1.xpose.msra.mxu0 0.0
    %410 = vmatprep.subr.mxu0 0.0
    %411 = vmatpush1.xpose.msra.mxu0 0.0
    %412 = vmatprep.subr.mxu0 0.0
    %413 = vmatpush1.xpose.msra.mxu0 0.0
    %414 = vmatprep.subr.mxu0 0.0
    %415 = vmatpush1.xpose.msra.mxu0 0.0
    %416 = vmatprep.subr.mxu0 0.0
    %417 = vmatpush1.xpose.msra.mxu0 0.0
    %418 = vmatprep.subr.mxu0 0.0
    %419 = vmatpush1.xpose.msra.mxu0 0.0
    %420 = vmatprep.subr.mxu0 0.0
    %421 = vmatpush1.xpose.msra.mxu0 0.0
    %422 = vmatprep.subr.mxu0 0.0
    %423 = vmatpush1.xpose.msra.mxu0 0.0
    %424 = vmatprep.subr.mxu0 0.0
    %425 = vmatpush1.xpose.msra.mxu0 0.0
    %426 = vmatprep.subr.mxu0 0.0
    %427 = vmatpush1.xpose.msra.mxu0 0.0
    %428 = vmatprep.subr.mxu0 0.0
    %429 = vmatpush1.xpose.msra.mxu0 0.0
    %430 = vmatprep.subr.mxu0 0.0
    %431 = vmatpush1.xpose.msra.mxu0 0.0
    %432 = vmatprep.subr.mxu0 0.0
    %433 = vmatpush1.xpose.msra.mxu0 0.0
    %434 = vmatprep.subr.mxu0 0.0
    %435 = vmatpush1.xpose.msra.mxu0 0.0
    %436 = vmatprep.subr.mxu0 0.0
    %437 = vmatpush1.xpose.msra.mxu0 0.0
    %438 = vmatprep.subr.mxu0 0.0
    %439 = vmatpush1.xpose.msra.mxu0 0.0
    %440 = vmatprep.subr.mxu0 0.0
    %441 = vmatpush1.xpose.msra.mxu0 0.0
    %442 = vmatprep.subr.mxu0 0.0
    %443 = vmatpush1.xpose.msra.mxu0 0.0
    %444 = vmatprep.subr.mxu0 0.0
    %445 = vmatpush1.xpose.msra.mxu0 0.0
    %446 = vmatprep.subr.mxu0 0.0
    %447 = vmatpush1.xpose.msra.mxu0 0.0
    %448 = vmatprep.subr.mxu0 0.0
    %449 = vmatpush1.xpose.msra.mxu0 0.0
    %450 = vmatprep.subr.mxu0 0.0
    %451 = vmatpush1.xpose.msra.mxu0 0.0
    %452 = vmatprep.subr.mxu0 0.0
    %453 = vmatpush1.xpose.msra.mxu0 0.0
    %454 = vmatprep.subr.mxu0 0.0
    %455 = vmatpush1.xpose.msra.mxu0 0.0
    %456 = vmatprep.subr.mxu0 0.0
    %457 = vmatpush1.xpose.msra.mxu0 0.0
    %458 = vmatprep.subr.mxu0 0.0
    %459 = vmatpush1.xpose.msra.mxu0 0.0
    %460 = vmatprep.subr.mxu0 0.0
    %461 = vmatpush1.xpose.msra.mxu0 0.0
    %462 = vmatprep.subr.mxu0 0.0
    %463 = vmatpush1.xpose.msra.mxu0 0.0
    %464 = vmatprep.mubr.f32.mxu0 0.0
    %465 = vmatmul.mubr.f32.gmra.mrb[0].mxu0 %v164
    %v466 = vpop.f32.mrb[0].mxu0
    %v467 = vadd.f32 0.0, %v466
    %v468 = vpop.f32.mrb[0].mxu0
    %469 = vdwg.mxu0
    %v470 = vsel %vm313, %v467, -inf
    %471 = vmax.xlane.f32.xlu0 %v470
    %v472 = vpop.xlane.xlu0 %471
    %v473 = vsub.f32 %v467, %v472
    %v474 = vmul.f32 %v473, 1.442695
    %v475 = vpow.pop %v474
    %v476 = vsel %vm313, %v475, 0.0
    %477 = vadd.xlane.f32.xlu0 %v476
    %v478 = vpop.xlane.xlu0 %477
    %v479 = vrcp.pop %v478
    %v480 = vmul.f32 %v475, %v479
    %s481 = scalar_lea.vmem [#allocation8], 8
    %482 = vst.msk [vmem:[%s481] sm:$0xff] %vm313, %v480
    %v484 = vsel %vm313, %v480, 0
    %486 = vmatprep.subr.mxu0 0.0
    %487 = vmatpush1.msra.mxu0 %v240
    %488 = vmatprep.subr.mxu0 0.0
    %489 = vmatpush1.msra.mxu0 0.0
    %490 = vmatprep.subr.mxu0 0.0
    %491 = vmatpush1.msra.mxu0 0.0
    %492 = vmatprep.subr.mxu0 0.0
    %493 = vmatpush1.msra.mxu0 0.0
    %494 = vmatprep.subr.mxu0 0.0
    %495 = vmatpush1.msra.mxu0 0.0
    %496 = vmatprep.subr.mxu0 0.0
    %497 = vmatpush1.msra.mxu0 0.0
    %498 = vmatprep.subr.mxu0 0.0
    %499 = vmatpush1.msra.mxu0 0.0
    %500 = vmatprep.subr.mxu0 0.0
    %501 = vmatpush1.msra.mxu0 0.0
    %502 = vmatprep.subr.mxu0 0.0
    %503 = vmatpush1.msra.mxu0 0.0
    %504 = vmatprep.subr.mxu0 0.0
    %505 = vmatpush1.msra.mxu0 0.0
    %506 = vmatprep.subr.mxu0 0.0
    %507 = vmatpush1.msra.mxu0 0.0
    %508 = vmatprep.subr.mxu0 0.0
    %509 = vmatpush1.msra.mxu0 0.0
    %510 = vmatprep.subr.mxu0 0.0
    %511 = vmatpush1.msra.mxu0 0.0
    %512 = vmatprep.subr.mxu0 0.0
    %513 = vmatpush1.msra.mxu0 0.0
    %514 = vmatprep.subr.mxu0 0.0
    %515 = vmatpush1.msra.mxu0 0.0
    %516 = vmatprep.subr.mxu0 0.0
    %517 = vmatpush1.msra.mxu0 0.0
    %518 = vmatprep.subr.mxu0 0.0
    %519 = vmatpush1.msra.mxu0 0.0
    %520 = vmatprep.subr.mxu0 0.0
    %521 = vmatpush1.msra.mxu0 0.0
    %522 = vmatprep.subr.mxu0 0.0
    %523 = vmatpush1.msra.mxu0 0.0
    %524 = vmatprep.subr.mxu0 0.0
    %525 = vmatpush1.msra.mxu0 0.0
    %526 = vmatprep.subr.mxu0 0.0
    %527 = vmatpush1.msra.mxu0 0.0
    %528 = vmatprep.subr.mxu0 0.0
    %529 = vmatpush1.msra.mxu0 0.0
    %530 = vmatprep.subr.mxu0 0.0
    %531 = vmatpush1.msra.mxu0 0.0
    %532 = vmatprep.subr.mxu0 0.0
    %533 = vmatpush1.msra.mxu0 0.0
    %534 = vmatprep.subr.mxu0 0.0
    %535 = vmatpush1.msra.mxu0 0.0
    %536 = vmatprep.subr.mxu0 0.0
    %537 = vmatpush1.msra.mxu0 0.0
    %538 = vmatprep.subr.mxu0 0.0
    %539 = vmatpush1.msra.mxu0 0.0
    %540 = vmatprep.subr.mxu0 0.0
    %541 = vmatpush1.msra.mxu0 0.0
    %542 = vmatprep.subr.mxu0 0.0
    %543 = vmatpush1.msra.mxu0 0.0
    %544 = vmatprep.subr.mxu0 0.0
    %545 = vmatpush1.msra.mxu0 0.0
    %546 = vmatprep.subr.mxu0 0.0
    %547 = vmatpush1.msra.mxu0 0.0
    %548 = vmatprep.subr.mxu0 0.0
    %549 = vmatpush1.msra.mxu0 0.0
    %550 = vmatprep.mubr.f32.mxu0 0.0
    %551 = vmatmul.mubr.f32.gmra.mrb[0].mxu0 %v484
    %v552 = vpop.f32.mrb[0].mxu0
    %v553 = vadd.f32 0.0, %v552
    %v554 = vpop.f32.mrb[0].mxu0
    %555 = vdwg.mxu0
    %s556 = scalar_lea.vmem [#allocation7], 8
    %557 = vst [vmem:[%s556] sm:$0xff] %v553
    // Predicated region
    $region22: #{tpu_custom_call.1} parent=1 // pred_check
      _
    $region23: #{tpu_custom_call.1} parent=1 // pred_check_branch
      %559 = sbr.rel (0) target = $region25
    $region24: #{tpu_custom_call.1} parent=1 // pred_region
      %s561 = ssub.s32 256, 256
      %562 = vsyncadd [#allocation4], %s561
      %s563 = sshll.u32 [#allocation7], 4
      %s564 = int_to_ptr.vmem [resolvable:$true] %s563
      %569 = dma.vmem_to_hbm [thread:$0]  %s564, 256, %s3, [#allocation4], 128, 128, 8
    $region25: #{tpu_custom_call.1} parent=1 // pred_fallthru
      _
    // Predicated region
    $region26: #{tpu_custom_call.1} parent=1 // pred_check
      _
    $region27: #{tpu_custom_call.1} parent=1 // pred_check_branch
      %571 = sbr.rel (0) target = $region29
    $region28: #{tpu_custom_call.1} parent=1 // pred_region
      %s573 = ssub.s32 256, 256
      %574 = vsyncadd [#allocation9], %s573
      %s575 = sshll.u32 [#allocation8], 4
      %s576 = int_to_ptr.vmem [resolvable:$true] %s575
      %581 = dma.vmem_to_hbm [thread:$0]  %s576, 256, %s4, [#allocation9], 128, 128, 8
    $region29: #{tpu_custom_call.1} parent=1 // pred_fallthru
      _
    // Predicated region
    $region30: #{tpu_custom_call.1} parent=1 // pred_check
      _
    $region31: #{tpu_custom_call.1} parent=1 // pred_check_branch
      %583 = sbr.rel (0) target = $region33
    $region32: #{tpu_custom_call.1} parent=1 // pred_region
      %584 = dma.done [#allocation4], 256
    $region33: #{tpu_custom_call.1} parent=1 // pred_fallthru
      _
    // Predicated region
    $region34: #{tpu_custom_call.1} parent=1 // pred_check
      _
    $region35: #{tpu_custom_call.1} parent=1 // pred_check_branch
      %586 = sbr.rel (0) target = $region37
    $region36: #{tpu_custom_call.1} parent=1 // pred_region
      %587 = dma.done [#allocation9], 256
    $region37: #{tpu_custom_call.1} parent=1 // pred_fallthru
      _
    %588 = vsyncpa [#allocation3], 1
    %589 = vsyncpa [#allocation6], 1
    %590 = vsyncpa [#allocation4], 1
    %591 = vsyncpa [#allocation9], 1

</llo_original>
